<compile_context>
chip_gen: v5e
topology: v5e:2x2
jax: 0.10.0
libtpu: 0.0.40
codegen_flags: <defaults>
</compile_context>

<pallas_src>
import jax
import jax.numpy as jnp
from jax.experimental import pallas as pl
from jax.experimental.pallas import tpu as pltpu

_LANE = 128                              # lane width
_SUBLANE = 8                             # f32 sublane tile
_CHUNK_ROWS = 512                        # rows per in-kernel accumulation step
_TARGET_BLOCK_BYTES = 4 * 1024 * 1024    # ~4 MiB streamed per input per step


def _sublane_multiple(dtype):
    # f32 -> 8, bf16/f16 -> 16, int8/fp8 -> 32 second-minor granularity.
    return max(_SUBLANE, 32 // jnp.dtype(dtype).itemsize)


def _smooth_l1(p, t):
    d = jnp.abs(p - t)
    return jnp.where(d < 1.0, 0.5 * d * d, d - 0.5)


def _smooth_l1_sum_jnp(p, t):
    """Tiny jnp fallback (sub-128-element tail / degenerate sizes)."""
    return jnp.sum(_smooth_l1(p.astype(jnp.float32), t.astype(jnp.float32)))


def _make_partial_kernel(*, n_tiles, tiles_per_split, block_rows, chunk_rows,
                         n_chunks, rows_total, needs_tile_guard, needs_row_mask):
    """Per-split (8,128) partial-sum kernel; closes over static config."""

    def kernel(pred_ref, target_ref, out_ref):
        s = pl.program_id(0)
        i = pl.program_id(1)

        @pl.when(i == 0)
        def _():
            out_ref[...] = jnp.zeros_like(out_ref)

        tile_idx = s * tiles_per_split + i

        def chunk_body(k, carry):
            if n_chunks == 1:
                r0 = 0
                p = pred_ref[...].astype(jnp.float32)
                t = target_ref[...].astype(jnp.float32)
            else:
                r0 = pl.multiple_of(k * chunk_rows, chunk_rows)
                p = pred_ref[pl.ds(r0, chunk_rows), :].astype(jnp.float32)
                t = target_ref[pl.ds(r0, chunk_rows), :].astype(jnp.float32)
            ret = _smooth_l1(p, t)
            if needs_row_mask:
                # Zero out rows past the logical end of the data (the edge
                # block's out-of-bounds sublanes contain unspecified values).
                row = (tile_idx * block_rows + r0
                       + jax.lax.broadcasted_iota(jnp.int32,
                                                  (chunk_rows, _LANE), 0))
                ret = jnp.where(row < rows_total, ret, 0.0)
            # Fold (chunk_rows, 128) into (8, 128): pure VPU adds each step;
            # the single cross-lane reduce happens once in the wrapper.
            out_ref[...] += ret.reshape(-1, _SUBLANE, _LANE).sum(axis=0)
            return carry

        def accumulate():
            if n_chunks == 1:
                chunk_body(0, 0)
            else:
                jax.lax.fori_loop(0, n_chunks, chunk_body, 0)

        if needs_tile_guard:
            # Ceil-split across TensorCores: the duplicated (clamped) last
            # tile on the second split must not be accumulated twice.
            pl.when(tile_idx < n_tiles)(accumulate)
        else:
            accumulate()

    return kernel


def smooth_l1_loss_pallas(pred, target, loss_weight=1.0):
    """Pallas implementation of SmoothL1Loss.forward (weight=None, 'mean')."""
    # TODO(synk): element-wise `weight`, sample_wise and 'none'/'sum' reduction
    # branches are not implemented (the default forward path uses weight=None
    # and reduction='mean').
    assert pred.shape == target.shape
    n_elems = pred.size

    flat_p = pred.reshape(-1)       # native dtype; f32 cast happens in-kernel
    flat_t = target.reshape(-1)

    rows_total = n_elems // _LANE
    row_mult = max(_sublane_multiple(pred.dtype), _sublane_multiple(target.dtype))
    itemsize = max(jnp.dtype(pred.dtype).itemsize, jnp.dtype(target.dtype).itemsize)

    # Dtype-aware block sizing: ~_TARGET_BLOCK_BYTES per input per grid step,
    # kept a multiple of the in-kernel chunk size.
    target_rows = max(
        _CHUNK_ROWS,
        (_TARGET_BLOCK_BYTES // (_LANE * itemsize)) // _CHUNK_ROWS * _CHUNK_ROWS)
    if rows_total >= target_rows:
        block_rows = target_rows
    else:
        block_rows = (rows_total // row_mult) * row_mult
        if block_rows > _CHUNK_ROWS:
            block_rows = (block_rows // _CHUNK_ROWS) * _CHUNK_ROWS

    if block_rows == 0:
        # Degenerate size (< one aligned row of 128 lanes): pure-jnp path.
        total = _smooth_l1_sum_jnp(flat_p, flat_t)
        return jnp.float32(loss_weight) * total / jnp.float32(n_elems)

    chunk_rows = min(_CHUNK_ROWS, block_rows)
    n_chunks = block_rows // chunk_rows
    n_tiles = pl.cdiv(rows_total, block_rows)

    # v7x: shard the streaming loop across both TensorCores.  Ceil-split so an
    # odd tile count no longer disables the split; harmless on v5e/v6e.
    n_splits = 2 if n_tiles >= 2 else 1
    tiles_per_split = pl.cdiv(n_tiles, n_splits)
    needs_tile_guard = (n_splits * tiles_per_split != n_tiles)
    needs_row_mask = (rows_total % block_rows != 0)

    bulk_len = rows_total * _LANE
    if bulk_len == n_elems:
        p2d = flat_p.reshape(rows_total, _LANE)
        t2d = flat_t.reshape(rows_total, _LANE)
    else:
        # Only a <128-element remainder is cut off here.
        # TODO(synk): for non-128-multiple sizes this slice may materialize a
        # copy ahead of the kernel; consider allow_input_fusion if profiled.
        p2d = flat_p[:bulk_len].reshape(rows_total, _LANE)
        t2d = flat_t[:bulk_len].reshape(rows_total, _LANE)

    def in_map(s, i):
        tile = s * tiles_per_split + i
        if needs_tile_guard:
            tile = jnp.minimum(tile, n_tiles - 1)   # clamp duplicate last tile
        return (tile, 0)

    kernel = _make_partial_kernel(
        n_tiles=n_tiles, tiles_per_split=tiles_per_split, block_rows=block_rows,
        chunk_rows=chunk_rows, n_chunks=n_chunks, rows_total=rows_total,
        needs_tile_guard=needs_tile_guard, needs_row_mask=needs_row_mask)

    bulk_bytes = bulk_len * (jnp.dtype(pred.dtype).itemsize
                             + jnp.dtype(target.dtype).itemsize)
    partials = pl.pallas_call(
        kernel,
        out_shape=jax.ShapeDtypeStruct((n_splits, _SUBLANE, _LANE), jnp.float32),
        grid=(n_splits, tiles_per_split),
        in_specs=[
            pl.BlockSpec((block_rows, _LANE), in_map),
            pl.BlockSpec((block_rows, _LANE), in_map),
        ],
        out_specs=pl.BlockSpec((None, _SUBLANE, _LANE), lambda s, i: (s, 0, 0)),
        compiler_params=pltpu.CompilerParams(
            dimension_semantics=("parallel", "arbitrary"),
            vmem_limit_bytes=32 * 1024 * 1024,
        ),
        cost_estimate=pl.CostEstimate(
            flops=6 * bulk_len,
            transcendentals=0,
            bytes_accessed=bulk_bytes + n_splits * _SUBLANE * _LANE * 4,
        ),
    )(p2d, t2d)
    bulk_sum = jnp.sum(partials)

    # Sub-128-element remainder (at most 127 elements), if any.
    if bulk_len < n_elems:
        tail_sum = _smooth_l1_sum_jnp(flat_p[bulk_len:], flat_t[bulk_len:])
    else:
        tail_sum = jnp.float32(0.0)

    mean_loss = (bulk_sum + tail_sum) / jnp.float32(n_elems)
    return jnp.float32(loss_weight) * mean_loss


def smooth_l1_loss_ref(pred, target, loss_weight=1.0):
    """Pure-JAX reference matching the PyTorch module."""
    t = jnp.abs(pred.astype(jnp.float32) - target.astype(jnp.float32))
    ret = jnp.where(t < 1.0, 0.5 * t * t, t - 0.5)
    return jnp.float32(loss_weight) * jnp.mean(ret)


if __name__ == "__main__":
    key = jax.random.PRNGKey(0)
    k1, k2, k3, k4, k5, k6 = jax.random.split(key, 6)

    # Primary check: module-shaped NCHW float32 input.
    N, C, H, W = 2, 4, 16, 16
    pred = jax.random.normal(k1, (N, C, H, W), dtype=jnp.float32)
    target = jax.random.normal(k2, (N, C, H, W), dtype=jnp.float32)
    out = jax.block_until_ready(smooth_l1_loss_pallas(pred, target, loss_weight=1.0))
    ref = smooth_l1_loss_ref(pred, target, loss_weight=1.0)
    assert jnp.allclose(out, ref, rtol=1e-4, atol=1e-6), (out, ref)

    # Secondary check: bf16 inputs with a row count that is not a multiple of
    # the block (exercises in-kernel cast, 2-split grid, and the row mask).
    pred_b = jax.random.normal(k3, (2, 4, 16, 20), dtype=jnp.bfloat16)
    target_b = jax.random.normal(k4, (2, 4, 16, 20), dtype=jnp.bfloat16)
    out_b = jax.block_until_ready(smooth_l1_loss_pallas(pred_b, target_b))
    ref_b = smooth_l1_loss_ref(pred_b, target_b)
    assert jnp.allclose(out_b, ref_b, rtol=1e-4, atol=1e-6), (out_b, ref_b)

    # Third check: multi-chunk in-kernel loop + partial last tile + 2-way
    # split (rows_total=2080 -> block_rows=2048, 4 chunks, masked edge block).
    pred_c = jax.random.normal(k5, (2, 8, 130, 128), dtype=jnp.float32)
    target_c = jax.random.normal(k6, (2, 8, 130, 128), dtype=jnp.float32)
    out_c = jax.block_until_ready(smooth_l1_loss_pallas(pred_c, target_c))
    ref_c = smooth_l1_loss_ref(pred_c, target_c)
    assert jnp.allclose(out_c, ref_c, rtol=1e-4, atol=1e-6), (out_c, ref_c)

    print("KERNEL_OK")
</pallas_src>

<mosaic_0001>
module attributes {stable_mosaic.version = 11 : i64} {
  func.func @kernel(%arg0: i32, %arg1: i32, %arg2: memref<16x128xf32, #tpu.memory_space<vmem>>, %arg3: memref<16x128xf32, #tpu.memory_space<vmem>>, %arg4: memref<1x8x128xf32, #tpu.memory_space<vmem>>) attributes {dimension_semantics = [#tpu.dimension_semantics<parallel>, #tpu.dimension_semantics<arbitrary>], iteration_bounds = array<i64: 1, 1>, scalar_prefetch = 0 : i64, scratch_operands = 0 : i64, tpu.core_type = #tpu.core_type<tc>, window_params = [{transform_indices = @transform_0, window_bounds = array<i64: 16, 128>}, {transform_indices = @transform_1, window_bounds = array<i64: 16, 128>}, {transform_indices = @transform_2, window_bounds = array<i64: 1, 8, 128>}]} {
    %c0_i32 = arith.constant 0 : i32
    %0 = arith.cmpi eq, %arg1, %c0_i32 : i32
    %1 = arith.extui %0 : i1 to i32
    %c0_i32_0 = arith.constant 0 : i32
    %2 = arith.cmpi ne, %1, %c0_i32_0 : i32
    scf.if %2 {
      %cst_13 = arith.constant 0.000000e+00 : f32
      %23 = vector.broadcast %cst_13 : f32 to vector<8x128xf32>
      %c0_14 = arith.constant 0 : index
      %c0_15 = arith.constant 0 : index
      %c0_16 = arith.constant 0 : index
      %24 = vector.load %arg4[%c0_14, %c0_15, %c0_16] : memref<1x8x128xf32, #tpu.memory_space<vmem>>, vector<1x8x128xf32>
      %25 = vector.shape_cast %24 : vector<1x8x128xf32> to vector<8x128xf32>
      %26 = vector.shape_cast %23 : vector<8x128xf32> to vector<1x8x128xf32>
      tpu.vector_store %arg4[%c0_14, %c0_15, %c0_16], %26 {strides = array<i32>} : memref<1x8x128xf32, #tpu.memory_space<vmem>>, vector<1x8x128xf32>,
    } else {
    }
    %c0 = arith.constant 0 : index
    %c0_1 = arith.constant 0 : index
    %3 = vector.load %arg2[%c0, %c0_1] : memref<16x128xf32, #tpu.memory_space<vmem>>, vector<16x128xf32>
    %c0_2 = arith.constant 0 : index
    %c0_3 = arith.constant 0 : index
    %4 = vector.load %arg3[%c0_2, %c0_3] : memref<16x128xf32, #tpu.memory_space<vmem>>, vector<16x128xf32>
    %5 = arith.subf %3, %4 : vector<16x128xf32>
    %6 = math.absf %5 : vector<16x128xf32>
    %cst = arith.constant 1.000000e+00 : f32
    %7 = vector.broadcast %cst : f32 to vector<16x128xf32>
    %8 = arith.cmpf olt, %6, %7 : vector<16x128xf32>
    %cst_4 = arith.constant 5.000000e-01 : f32
    %9 = vector.broadcast %cst_4 : f32 to vector<16x128xf32>
    %10 = arith.mulf %9, %6 : vector<16x128xf32>
    %11 = arith.mulf %10, %6 : vector<16x128xf32>
    %cst_5 = arith.constant 5.000000e-01 : f32
    %12 = vector.broadcast %cst_5 : f32 to vector<16x128xf32>
    %13 = arith.subf %6, %12 : vector<16x128xf32>
    %14 = arith.select %8, %11, %13 : vector<16x128xi1>, vector<16x128xf32>
    %c0_6 = arith.constant 0 : index
    %c0_7 = arith.constant 0 : index
    %c0_8 = arith.constant 0 : index
    %15 = vector.load %arg4[%c0_6, %c0_7, %c0_8] : memref<1x8x128xf32, #tpu.memory_space<vmem>>, vector<1x8x128xf32>
    %16 = vector.shape_cast %15 : vector<1x8x128xf32> to vector<8x128xf32>
    %17 = vector.shape_cast %14 : vector<16x128xf32> to vector<2x8x128xf32>
    %cst_9 = arith.constant dense<0.000000e+00> : vector<8x128xf32>
    %18 = vector.multi_reduction <add>, %17, %cst_9 [0] : vector<2x8x128xf32> to vector<8x128xf32>
    %19 = arith.addf %16, %18 : vector<8x128xf32>
    %c0_10 = arith.constant 0 : index
    %c0_11 = arith.constant 0 : index
    %c0_12 = arith.constant 0 : index
    %20 = vector.load %arg4[%c0_10, %c0_11, %c0_12] : memref<1x8x128xf32, #tpu.memory_space<vmem>>, vector<1x8x128xf32>
    %21 = vector.shape_cast %20 : vector<1x8x128xf32> to vector<8x128xf32>
    %22 = vector.shape_cast %19 : vector<8x128xf32> to vector<1x8x128xf32>
    tpu.vector_store %arg4[%c0_10, %c0_11, %c0_12], %22 {strides = array<i32>} : memref<1x8x128xf32, #tpu.memory_space<vmem>>, vector<1x8x128xf32>,
    return
  }
  func.func @transform_0(%arg0: i32, %arg1: i32) -> (i32, i32) {
    %c1_i32 = arith.constant 1 : i32
    %0 = arith.muli %arg0, %c1_i32 : i32
    %1 = arith.addi %0, %arg1 : i32
    %c0_i32 = arith.constant 0 : i32
    %c0_i32_0 = arith.constant 0 : i32
    return %1, %c0_i32 : i32, i32
  }
  func.func @transform_1(%arg0: i32, %arg1: i32) -> (i32, i32) {
    %c1_i32 = arith.constant 1 : i32
    %0 = arith.muli %arg0, %c1_i32 : i32
    %1 = arith.addi %0, %arg1 : i32
    %c0_i32 = arith.constant 0 : i32
    %c0_i32_0 = arith.constant 0 : i32
    return %1, %c0_i32 : i32, i32
  }
  func.func @transform_2(%arg0: i32, %arg1: i32) -> (i32, i32, i32) {
    %c0_i32 = arith.constant 0 : i32
    %c0_i32_0 = arith.constant 0 : i32
    %c0_i32_1 = arith.constant 0 : i32
    return %arg0, %c0_i32, %c0_i32_0 : i32, i32, i32
  }
}

</mosaic_0001>

<llo_original>
// kernel: tpu_custom_call.1
$region0: #{tpu_custom_call.1}
  #allocation0 [shape = 'u32[]', space=smem, size = 0x4, offset = 0x4, fixed_abs, tag = 'smem constant byte address 0x4 - core index']
  #allocation1 [shape = 'u32[72,128]{1,0:T(1,128)}', space=vmem, size = 0x9000, scoped, tag = 'internal scratch']
  %s0 = inlined_call_operand.hbm [shape: f32[16,128], index: 0, kind: input, shape index: {}]
  %s1 = inlined_call_operand.hbm [shape: f32[16,128], index: 1, kind: input, shape index: {}]
  %s2 = inlined_call_operand.hbm [shape: f32[1,8,128], index: 2, kind: output, shape index: {}]
  %s3 = sld [smem:[#allocation0]]
  $region30: #{tpu_custom_call.1} parent=0
    _
  %s5 = ssub.s32 1, %s3
  %s6 = scalar_select 0, %s5, %s3
  $region1: #{tpu_custom_call.1} parent=0
    #allocation2 [shape = 'u8[8192]{0}', space=vmem, size = 0x2000, scoped, tag = 'input window, operand 0, single buffered']
    #allocation3 [shape = 's32[1]{0}', space=sflag, size = 0x4, scoped, tag = 'scoped memory for tpu_custom_call.1']
    #allocation4 [shape = 's32[1]{0}', space=sflag, size = 0x4, scoped, tag = 'scoped memory for tpu_custom_call.1']
    #allocation5 [shape = 'u8[8192]{0}', space=vmem, size = 0x2000, scoped, tag = 'input window, operand 1, single buffered']
    #allocation6 [shape = 's32[1]{0}', space=sflag, size = 0x4, scoped, tag = 'scoped memory for tpu_custom_call.1']
    #allocation7 [shape = 'u8[4096]{0}', space=vmem, size = 0x1000, scoped, tag = 'output window, operand 0, single buffered']
    %7 = vsyncpa [#allocation3], 0
    %8 = vsyncpa [#allocation6], 0
    %9 = vsyncpa [#allocation4], 0
    // Predicated region
    $region2: #{tpu_custom_call.1} parent=1 // pred_check
      _
    $region3: #{tpu_custom_call.1} parent=1 // pred_check_branch
      %11 = sbr.rel (0) target = $region5
    $region4: #{tpu_custom_call.1} parent=1 // pred_region
      %s12 = sadd.s32 0, 0
      %s13 = smul.u32 2, %s12
      %15 = vsyncadd [#allocation3], 0
      %s16 = smul.addr %s13, 8
      %s17 = scalar_lea.hbm %s0, %s16
      %s18 = sshll.u32 %s17, 4
      %s19 = int_to_ptr.hbm [resolvable:$true] %s18
      %s20 = sshll.u32 [#allocation2], 4
      %s21 = int_to_ptr.vmem [resolvable:$true] %s20
      %26 = dma.hbm_to_vmem [thread:$0]  %s19, 256, %s21, [#allocation3], 128, 128, 8
    $region5: #{tpu_custom_call.1} parent=1 // pred_fallthru
      _
    // Predicated region
    $region6: #{tpu_custom_call.1} parent=1 // pred_check
      _
    $region7: #{tpu_custom_call.1} parent=1 // pred_check_branch
      %28 = sbr.rel (0) target = $region9
    $region8: #{tpu_custom_call.1} parent=1 // pred_region
      %s29 = sadd.s32 0, 0
      %s30 = smul.u32 2, %s29
      %32 = vsyncadd [#allocation6], 0
      %s33 = smul.addr %s30, 8
      %s34 = scalar_lea.hbm %s1, %s33
      %s35 = sshll.u32 %s34, 4
      %s36 = int_to_ptr.hbm [resolvable:$true] %s35
      %s37 = sshll.u32 [#allocation5], 4
      %s38 = int_to_ptr.vmem [resolvable:$true] %s37
      %43 = dma.hbm_to_vmem [thread:$0]  %s36, 256, %s38, [#allocation6], 128, 128, 8
    $region9: #{tpu_custom_call.1} parent=1 // pred_fallthru
      _
    // Predicated region
    $region10: #{tpu_custom_call.1} parent=1 // pred_check
      _
    $region11: #{tpu_custom_call.1} parent=1 // pred_check_branch
      %45 = sbr.rel (0) target = $region13
    $region12: #{tpu_custom_call.1} parent=1 // pred_region
      %47 = dma.done [#allocation3], 256
    $region13: #{tpu_custom_call.1} parent=1 // pred_fallthru
      _
    // Predicated region
    $region14: #{tpu_custom_call.1} parent=1 // pred_check
      _
    $region15: #{tpu_custom_call.1} parent=1 // pred_check_branch
      %49 = sbr.rel (0) target = $region17
    $region16: #{tpu_custom_call.1} parent=1 // pred_region
      %51 = dma.done [#allocation6], 256
    $region17: #{tpu_custom_call.1} parent=1 // pred_fallthru
      _
    %s52 = sadd.s32 0, 0
    %s53 = smul.u32 2, %s52
    %s54 = sadd.s32 0, 0
    %s55 = smul.u32 2, %s54
    %p56 = scmp.eq.s32.totalorder 0, 0
    // Predicated region
    $region18: #{tpu_custom_call.1} parent=1 // pred_check
      %p57 = pneg %p56
    $region19: #{tpu_custom_call.1} parent=1 // pred_check_branch
      %59 = sbr.rel (%p57) target = $region21
    $region20: #{tpu_custom_call.1} parent=1 // pred_region
      %60 = vst [vmem:[#allocation7] sm:$0xff] 0.0
    $region21: #{tpu_custom_call.1} parent=1 // pred_fallthru
      _
    %v61 = vld [vmem:[#allocation2] sm:$0xff]
    %v62 = vld [vmem:[#allocation2 + $0x8] sm:$0xff]
    %v63 = vld [vmem:[#allocation5] sm:$0xff]
    %v64 = vld [vmem:[#allocation5 + $0x8] sm:$0xff]
    %v65 = vsub.f32 %v61, %v63
    %v66 = vsub.f32 %v62, %v64
    %v67 = vand.u32 2147483647, %v65
    %v68 = vand.u32 2147483647, %v66
    %vm69 = vcmp.lt.f32.partialorder %v67, 1.0
    %vm70 = vcmp.lt.f32.partialorder %v68, 1.0
    %v71 = vmul.f32 %v67, 0.5
    %v72 = vmul.f32 %v68, 0.5
    %v73 = vmul.f32 %v71, %v67
    %v74 = vmul.f32 %v72, %v68
    %v75 = vsub.f32 %v67, 0.5
    %v76 = vsub.f32 %v68, 0.5
    %v77 = vsel %vm69, %v73, %v75
    %v78 = vsel %vm70, %v74, %v76
    %v79 = vld [vmem:[#allocation7] sm:$0xff]
    %v80 = vadd.f32 %v77, %v78
    %v81 = vadd.f32 %v79, %v80
    %82 = vst [vmem:[#allocation7] sm:$0xff] %v81
    // Predicated region
    $region22: #{tpu_custom_call.1} parent=1 // pred_check
      _
    $region23: #{tpu_custom_call.1} parent=1 // pred_check_branch
      %84 = sbr.rel (0) target = $region25
    $region24: #{tpu_custom_call.1} parent=1 // pred_region
      %86 = vsyncadd [#allocation4], 0
      %s88 = sshll.u32 [#allocation7], 4
      %s89 = int_to_ptr.vmem [resolvable:$true] %s88
      %s90 = sshll.u32 %s2, 4
      %s91 = int_to_ptr.hbm [resolvable:$true] %s90
      %93 = dma.vmem_to_hbm [thread:$0]  %s89, 128, %s91, [#allocation4]
    $region25: #{tpu_custom_call.1} parent=1 // pred_fallthru
      _
    // Predicated region
    $region26: #{tpu_custom_call.1} parent=1 // pred_check
      _
    $region27: #{tpu_custom_call.1} parent=1 // pred_check_branch
      %95 = sbr.rel (0) target = $region29
    $region28: #{tpu_custom_call.1} parent=1 // pred_region
      %97 = dma.done [#allocation4], 128
    $region29: #{tpu_custom_call.1} parent=1 // pred_fallthru
      _
    %98 = vsyncpa [#allocation3], 1
    %99 = vsyncpa [#allocation6], 1
    %100 = vsyncpa [#allocation4], 1

</llo_original>
